<compile_context>
chip_gen: v6e
topology: v6e:2x2x1
jax: 0.10.0
libtpu: 0.0.40
codegen_flags: <defaults>
</compile_context>

<pallas_src>
import functools

import jax
import jax.numpy as jnp
from jax.experimental import pallas as pl
from jax.experimental.pallas import tpu as pltpu

RELU_SLOPE = 0.1  # HiFi-GAN leaky-relu slope

_VMEM_LIMIT = 48 * 1024 * 1024        # < v7x 64 MiB physical, > v5e 16 MiB default scoped
_TILE_BYTES_BUDGET = 24 * 1024 * 1024  # double-buffered bf16 (w + x) tiles, im2col GEMM
_RESIDENT_BUDGET = 30 * 1024 * 1024    # resident-x working set gate for stride-1 kernel


def get_padding(kernel_size, dilation=1):
    return (kernel_size * dilation - dilation) // 2


def _round_up(x, m):
    return (x + m - 1) // m * m


def _cdiv(a, b):
    return (a + b - 1) // b


# --------------------------------------------------------------------------- #
# Kernel bodies
# --------------------------------------------------------------------------- #
def _gemm_single_kernel(w_ref, x_ref, b_ref, o_ref, *, apply_act, slope):
    """Whole reduction in one block: (tm, R) @ (R, tn); no scratch, no zero-init."""
    y = jnp.dot(w_ref[...], x_ref[...], preferred_element_type=jnp.float32)
    y = y + b_ref[...]                       # (tm, tn) + (tm, 1)
    if apply_act:
        y = jnp.maximum(y, slope * y)        # leaky relu, single VALU op
    o_ref[...] = y.astype(o_ref.dtype)       # bf16 writeback for intermediate layers


def _gemm_multi_kernel(w_ref, x_ref, b_ref, o_ref, acc_ref, *, apply_act, slope):
    """Tiled-reduction fallback (grid axis 2 = reduction)."""
    k = pl.program_id(2)
    prod = jnp.dot(w_ref[...], x_ref[...], preferred_element_type=jnp.float32)

    @pl.when(k == 0)
    def _():
        acc_ref[...] = prod                  # direct assign: no zero-init pass

    @pl.when(k > 0)
    def _():
        acc_ref[...] += prod

    @pl.when(k == pl.num_programs(2) - 1)
    def _():
        y = acc_ref[...] + b_ref[...]
        if apply_act:
            y = jnp.maximum(y, slope * y)
        o_ref[...] = y.astype(o_ref.dtype)


def _conv_s1_kernel(w_ref, x_ref, b_ref, o_ref, *, taps, shift, tn, halo,
                    apply_act, slope):
    """Stride-1 conv, no im2col duplication.

    w_ref: (K, tm, Cin) bf16; x_ref: (Cin, Nx_pad) bf16, whole activation resident
    in VMEM (constant index_map); b_ref: (tm, 1) f32; o_ref: (tm, tn).
    Output column n uses input columns n + k*shift (shift = period W).
    """
    j = pl.program_id(1)
    start = pl.multiple_of(j * tn, tn)                       # 128-aligned dynamic start
    window = x_ref[:, pl.ds(start, tn + halo)]               # (Cin, tn + halo) bf16
    acc = jnp.dot(w_ref[0], window[:, :tn],
                  preferred_element_type=jnp.float32)
    for k in range(1, taps):
        # static lane-offset slice of the on-chip window (no extra HBM reads)
        xk = window[:, k * shift: k * shift + tn]
        acc += jnp.dot(w_ref[k], xk, preferred_element_type=jnp.float32)
    y = acc + b_ref[...]
    if apply_act:
        y = jnp.maximum(y, slope * y)
    o_ref[...] = y.astype(o_ref.dtype)


# --------------------------------------------------------------------------- #
# Wrappers
# --------------------------------------------------------------------------- #
def _conv_im2col(x_cb, weight, bias, stride, padding, apply_act, out_dtype):
    """(K,1) conv as an im2col GEMM. x_cb is (Cin, B, H, W) bf16."""
    Cin, B, H, W = x_cb.shape
    Cout, _, K, _ = weight.shape
    Hpad = H + 2 * padding
    Hout = (Hpad - K) // stride + 1

    x_p = jnp.pad(x_cb, ((0, 0), (0, 0), (padding, padding), (0, 0)))
    taps = [x_p[:, :, k: k + stride * (Hout - 1) + 1: stride, :] for k in range(K)]
    cols = jnp.stack(taps, axis=0)                   # (K, Cin, B, Hout, W)
    R = K * Cin
    N = B * Hout * W
    x_col = cols.reshape(R, N)                       # rows ordered k*Cin + ci (bf16)

    w_mat = jnp.transpose(weight[:, :, :, 0], (0, 2, 1)).reshape(Cout, R)
    w_mat = w_mat.astype(jnp.bfloat16)

    # ---- tile selection: prefer a single full-R reduction block ----
    tm = min(_round_up(Cout, 16), 512)
    tn = min(_round_up(N, 128), 2048)

    def dbuf_bytes(tk_, tn_):                        # double-buffered bf16 x + w tiles
        return 2 * 2 * (tk_ * tn_ + tm * tk_)

    tk = R
    while dbuf_bytes(tk, tn) > _TILE_BYTES_BUDGET and tn > 256:
        tn = _round_up(tn // 2, 128)
    single_k = dbuf_bytes(tk, tn) <= _TILE_BYTES_BUDGET
    if single_k:
        R_pad = R                                    # full-dim block: no R padding needed
    else:
        tk = 256
        R_pad = _round_up(R, tk)

    Cout_pad = _round_up(Cout, tm)
    N_pad = _round_up(N, tn)

    if N_pad != N or R_pad != R:
        x_col = jnp.pad(x_col, ((0, R_pad - R), (0, N_pad - N)))
    if Cout_pad != Cout or R_pad != R:
        w_mat = jnp.pad(w_mat, ((0, Cout_pad - Cout), (0, R_pad - R)))
    b_col = bias.astype(jnp.float32)
    if Cout_pad != Cout:
        b_col = jnp.pad(b_col, (0, Cout_pad - Cout))
    b_col = b_col.reshape(Cout_pad, 1)

    out_itemsize = jnp.dtype(out_dtype).itemsize
    cost = pl.CostEstimate(
        flops=2 * Cout_pad * R_pad * N_pad,
        transcendentals=0,
        bytes_accessed=(Cout_pad * R_pad + R_pad * N_pad) * 2
        + Cout_pad * N_pad * out_itemsize + Cout_pad * 4,
    )

    if single_k:
        grid = (Cout_pad // tm, N_pad // tn)
        y = pl.pallas_call(
            functools.partial(_gemm_single_kernel, apply_act=apply_act,
                              slope=RELU_SLOPE),
            out_shape=jax.ShapeDtypeStruct((Cout_pad, N_pad), out_dtype),
            grid_spec=pltpu.PrefetchScalarGridSpec(
                num_scalar_prefetch=0,
                grid=grid,
                in_specs=[
                    pl.BlockSpec((tm, R_pad), lambda i, j: (i, 0)),   # weight tile
                    pl.BlockSpec((R_pad, tn), lambda i, j: (0, j)),   # im2col tile
                    pl.BlockSpec((tm, 1), lambda i, j: (i, 0)),       # bias tile
                ],
                out_specs=pl.BlockSpec((tm, tn), lambda i, j: (i, j)),
            ),
            compiler_params=pltpu.CompilerParams(
                dimension_semantics=("parallel", "parallel"),
                vmem_limit_bytes=_VMEM_LIMIT,
            ),
            cost_estimate=cost,
        )(w_mat, x_col, b_col)
    else:
        grid = (Cout_pad // tm, N_pad // tn, R_pad // tk)
        y = pl.pallas_call(
            functools.partial(_gemm_multi_kernel, apply_act=apply_act,
                              slope=RELU_SLOPE),
            out_shape=jax.ShapeDtypeStruct((Cout_pad, N_pad), out_dtype),
            grid_spec=pltpu.PrefetchScalarGridSpec(
                num_scalar_prefetch=0,
                grid=grid,
                in_specs=[
                    pl.BlockSpec((tm, tk), lambda i, j, k: (i, k)),
                    pl.BlockSpec((tk, tn), lambda i, j, k: (k, j)),
                    pl.BlockSpec((tm, 1), lambda i, j, k: (i, 0)),
                ],
                out_specs=pl.BlockSpec((tm, tn), lambda i, j, k: (i, j)),
                scratch_shapes=[pltpu.VMEM((tm, tn), jnp.float32)],
            ),
            compiler_params=pltpu.CompilerParams(
                dimension_semantics=("parallel", "parallel", "arbitrary"),
                vmem_limit_bytes=_VMEM_LIMIT,
            ),
            cost_estimate=cost,
        )(w_mat, x_col, b_col)

    return y[:Cout, :N].reshape(Cout, B, Hout, W)


def _conv_s1_resident(x_cb, weight, bias, padding, apply_act, out_dtype):
    """Stride-1 (K,1) conv without im2col duplication (whole activation in VMEM)."""
    Cin, B, H, W = x_cb.shape
    Cout, _, K, _ = weight.shape
    Hpad = H + 2 * padding
    Hout = Hpad - K + 1

    x_p = jnp.pad(x_cb, ((0, 0), (0, 0), (padding, padding), (0, 0)))
    Nx = B * Hpad * W
    M = Nx - (K - 1) * W                       # shifted-sum output columns
    x_flat = x_p.reshape(Cin, Nx)

    tm = min(_round_up(Cout, 16), 512)
    tn = min(_round_up(M, 128), 1024)
    nj = _cdiv(M, tn)
    Nout_pad = nj * tn
    halo = _round_up((K - 1) * W, 128)
    Nx_pad = Nout_pad + halo
    x_flat = jnp.pad(x_flat, ((0, 0), (0, Nx_pad - Nx)))

    Cout_pad = _round_up(Cout, tm)
    w_s1 = jnp.transpose(weight[:, :, :, 0], (2, 0, 1)).astype(jnp.bfloat16)  # (K,Cout,Cin)
    if Cout_pad != Cout:
        w_s1 = jnp.pad(w_s1, ((0, 0), (0, Cout_pad - Cout), (0, 0)))
    b_col = bias.astype(jnp.float32)
    if Cout_pad != Cout:
        b_col = jnp.pad(b_col, (0, Cout_pad - Cout))
    b_col = b_col.reshape(Cout_pad, 1)

    out_itemsize = jnp.dtype(out_dtype).itemsize
    cost = pl.CostEstimate(
        flops=2 * Cout_pad * K * Cin * Nout_pad,
        transcendentals=0,
        bytes_accessed=(K * Cout_pad * Cin + Cin * Nx_pad) * 2
        + Cout_pad * Nout_pad * out_itemsize + Cout_pad * 4,
    )

    y = pl.pallas_call(
        functools.partial(_conv_s1_kernel, taps=K, shift=W, tn=tn, halo=halo,
                          apply_act=apply_act, slope=RELU_SLOPE),
        out_shape=jax.ShapeDtypeStruct((Cout_pad, Nout_pad), out_dtype),
        grid_spec=pltpu.PrefetchScalarGridSpec(
            num_scalar_prefetch=0,
            grid=(Cout_pad // tm, nj),
            in_specs=[
                pl.BlockSpec((K, tm, Cin), lambda i, j: (0, i, 0)),   # all taps for tile
                pl.BlockSpec((Cin, Nx_pad), lambda i, j: (0, 0)),     # resident activation
                pl.BlockSpec((tm, 1), lambda i, j: (i, 0)),           # bias
            ],
            out_specs=pl.BlockSpec((tm, tn), lambda i, j: (i, j)),
        ),
        compiler_params=pltpu.CompilerParams(
            dimension_semantics=("parallel", "parallel"),
            vmem_limit_bytes=_VMEM_LIMIT,
        ),
        cost_estimate=cost,
    )(w_s1, x_flat, b_col)

    # recover (Cout, B, Hout, W): columns with h >= Hout are garbage and sliced off
    y = y[:Cout, :M]
    if Nx != M:
        y = jnp.pad(y, ((0, 0), (0, Nx - M)))
    return y.reshape(Cout, B, Hpad, W)[:, :, :Hout, :]


def conv2d_kx1(x_cb, weight, bias, stride, padding, apply_act, out_dtype):
    """Conv2d with kernel (K,1) on a (Cin, B, H, W) activation; returns (Cout, B, Hout, W)."""
    Cin, B, H, W = x_cb.shape
    Cout, _, K, _ = weight.shape
    x_cb = x_cb.astype(jnp.bfloat16)
    if stride == 1:
        Hpad = H + 2 * padding
        Nx = B * Hpad * W
        est = 2 * 2 * Cin * (_round_up(Nx, 1024) + 256)               # dbuf bf16 x
        est += 2 * 2 * K * min(_round_up(Cout, 16), 512) * Cin        # dbuf bf16 w
        if est <= _RESIDENT_BUDGET:
            return _conv_s1_resident(x_cb, weight, bias, padding, apply_act, out_dtype)
    # stride-3 layers (and oversized stride-1 fallback): im2col GEMM
    return _conv_im2col(x_cb, weight, bias, stride, padding, apply_act, out_dtype)


# --------------------------------------------------------------------------- #
# Parameter init (deterministic; weight_norm at init == plain weight)
# --------------------------------------------------------------------------- #
def init_params(key, kernel_size=5, stride=3):
    convs = []
    channels = [(1, 32), (32, 128), (128, 512), (512, 1024)]
    for ci, co in channels:
        key, kw, kb = jax.random.split(key, 3)
        w = jax.random.normal(kw, (co, ci, kernel_size, 1), jnp.float32) * 0.05
        b = jax.random.normal(kb, (co,), jnp.float32) * 0.05
        convs.append((w, b, stride, get_padding(5, 1)))
    key, kw, kb = jax.random.split(key, 3)
    convs.append(
        (
            jax.random.normal(kw, (1024, 1024, kernel_size, 1), jnp.float32) * 0.05,
            jax.random.normal(kb, (1024,), jnp.float32) * 0.05,
            1,
            2,
        )
    )
    key, kw, kb = jax.random.split(key, 3)
    post = (
        jax.random.normal(kw, (1, 1024, 3, 1), jnp.float32) * 0.05,
        jax.random.normal(kb, (1,), jnp.float32) * 0.05,
        1,
        1,
    )
    return convs, post


# --------------------------------------------------------------------------- #
# Forward pass (matches PeriodSubDiscriminator.forward)
# --------------------------------------------------------------------------- #
def period_sub_discriminator_forward(audio, convs, post, period):
    B, C, T = audio.shape
    if T % period != 0:
        to_pad = period - T % period
        audio = jnp.pad(audio, ((0, 0), (0, 0), (0, to_pad)), mode="reflect")
        T = T + to_pad
    x_nchw = audio.reshape(B, C, T // period, period)
    # inter-layer activations stay in (C, B, H, W) bf16 (no transpose round-trips)
    x_cb = jnp.transpose(x_nchw, (1, 0, 2, 3)).astype(jnp.bfloat16)

    features = []
    for w, b, s, p in convs:
        x_cb = conv2d_kx1(x_cb, w, b, s, p, apply_act=True, out_dtype=jnp.bfloat16)
        # NCHW f32 only for the returned feature tensors
        features.append(jnp.transpose(x_cb, (1, 0, 2, 3)).astype(jnp.float32))
    w, b, s, p = post
    x_cb = conv2d_kx1(x_cb, w, b, s, p, apply_act=False, out_dtype=jnp.float32)
    x_nchw = jnp.transpose(x_cb, (1, 0, 2, 3))
    features.append(x_nchw)

    output = x_nchw.reshape(B, -1)  # torch.flatten(x, 1, -1) on NCHW row-major
    return output, features


# --------------------------------------------------------------------------- #
# Pure-JAX reference (for correctness check)
# --------------------------------------------------------------------------- #
def _conv2d_ref(x, w, b, stride, padding):
    y = jax.lax.conv_general_dilated(
        x.astype(jnp.float32),
        w.astype(jnp.float32),
        window_strides=(stride, 1),
        padding=((padding, padding), (0, 0)),
        dimension_numbers=("NCHW", "OIHW", "NCHW"),
    )
    return y + b.reshape(1, -1, 1, 1)


def period_sub_discriminator_ref(audio, convs, post, period):
    B, C, T = audio.shape
    if T % period != 0:
        to_pad = period - T % period
        audio = jnp.pad(audio, ((0, 0), (0, 0), (0, to_pad)), mode="reflect")
        T = T + to_pad
    x = audio.reshape(B, C, T // period, period)
    features = []
    for w, b, s, p in convs:
        y = _conv2d_ref(x, w, b, s, p)
        x = jnp.where(y >= 0.0, y, RELU_SLOPE * y)
        features.append(x)
    w, b, s, p = post
    x = _conv2d_ref(x, w, b, s, p)
    features.append(x)
    return x.reshape(B, -1), features


if __name__ == "__main__":
    key = jax.random.PRNGKey(0)
    key, k_audio, k_params = jax.random.split(key, 3)

    period = 4
    B, C, T = 2, 1, 46  # T % period != 0 -> exercises the reflect-pad path
    audio = jax.random.normal(k_audio, (B, C, T), jnp.float32)

    convs, post = init_params(k_params)

    output, features = period_sub_discriminator_forward(audio, convs, post, period)
    output = jax.block_until_ready(output)
    for f in features:
        jax.block_until_ready(f)

    ref_out, ref_feats = period_sub_discriminator_ref(audio, convs, post, period)

    assert output.ndim == 2 and output.shape == ref_out.shape
    assert len(features) == len(ref_feats) == 6
    for f, rf in zip(features, ref_feats):
        assert f.shape == rf.shape
    # bf16 MXU operands / bf16 inter-layer activations with f32 accumulation
    # -> loose tolerance vs the f32 reference
    max_err = float(jnp.max(jnp.abs(output - ref_out)))
    assert jnp.allclose(output, ref_out, rtol=1e-1, atol=3e-2), max_err

    print("KERNEL_OK")
</pallas_src>

<mosaic_0001>
module attributes {stable_mosaic.version = 11 : i64} {
  func.func @_gemm_single_kernel(%arg0: i32, %arg1: i32, %arg2: memref<32x5xbf16, #tpu.memory_space<vmem>>, %arg3: memref<5x128xbf16, #tpu.memory_space<vmem>>, %arg4: memref<32x1xf32, #tpu.memory_space<vmem>>, %arg5: memref<32x128xbf16, #tpu.memory_space<vmem>>) attributes {dimension_semantics = [#tpu.dimension_semantics<parallel>, #tpu.dimension_semantics<parallel>], iteration_bounds = array<i64: 1, 1>, scalar_prefetch = 0 : i64, scratch_operands = 0 : i64, tpu.core_type = #tpu.core_type<tc>, window_params = [{transform_indices = @transform_0, window_bounds = array<i64: 32, 5>}, {transform_indices = @transform_1, window_bounds = array<i64: 5, 128>}, {transform_indices = @transform_2, window_bounds = array<i64: 32, 1>}, {transform_indices = @transform_3, window_bounds = array<i64: 32, 128>}]} {
    %c0 = arith.constant 0 : index
    %c0_0 = arith.constant 0 : index
    %0 = vector.load %arg2[%c0, %c0_0] : memref<32x5xbf16, #tpu.memory_space<vmem>>, vector<32x5xbf16>
    %c0_1 = arith.constant 0 : index
    %c0_2 = arith.constant 0 : index
    %1 = vector.load %arg3[%c0_1, %c0_2] : memref<5x128xbf16, #tpu.memory_space<vmem>>, vector<5x128xbf16>
    %cst = arith.constant dense<0.000000e+00> : vector<32x128xf32>
    %2 = tpu.matmul %0, %1, %cst {dimension_numbers = #tpu.dot_dimension_numbers<[1], [0], [0], [1], [0, 0, 1, 1], [], []>} : vector<32x5xbf16>, vector<5x128xbf16>, vector<32x128xf32> -> vector<32x128xf32>
    %c0_3 = arith.constant 0 : index
    %c0_4 = arith.constant 0 : index
    %3 = vector.load %arg4[%c0_3, %c0_4] : memref<32x1xf32, #tpu.memory_space<vmem>>, vector<32x1xf32>
    %4 = vector.broadcast %3 : vector<32x1xf32> to vector<32x128xf32>
    %5 = arith.addf %2, %4 : vector<32x128xf32>
    %cst_5 = arith.constant 1.000000e-01 : f32
    %6 = vector.broadcast %cst_5 : f32 to vector<32x128xf32>
    %7 = arith.mulf %6, %5 : vector<32x128xf32>
    %8 = arith.maximumf %5, %7 : vector<32x128xf32>
    %9 = arith.truncf %8 : vector<32x128xf32> to vector<32x128xbf16>
    %c0_6 = arith.constant 0 : index
    %c0_7 = arith.constant 0 : index
    %10 = vector.load %arg5[%c0_6, %c0_7] : memref<32x128xbf16, #tpu.memory_space<vmem>>, vector<32x128xbf16>
    tpu.vector_store %arg5[%c0_6, %c0_7], %9 {strides = array<i32>} : memref<32x128xbf16, #tpu.memory_space<vmem>>, vector<32x128xbf16>,
    return
  }
  func.func @transform_0(%arg0: i32, %arg1: i32) -> (i32, i32) {
    %c0_i32 = arith.constant 0 : i32
    %c0_i32_0 = arith.constant 0 : i32
    return %arg0, %c0_i32 : i32, i32
  }
  func.func @transform_1(%arg0: i32, %arg1: i32) -> (i32, i32) {
    %c0_i32 = arith.constant 0 : i32
    %c0_i32_0 = arith.constant 0 : i32
    return %c0_i32, %arg1 : i32, i32
  }
  func.func @transform_2(%arg0: i32, %arg1: i32) -> (i32, i32) {
    %c0_i32 = arith.constant 0 : i32
    %c0_i32_0 = arith.constant 0 : i32
    return %arg0, %c0_i32 : i32, i32
  }
  func.func @transform_3(%arg0: i32, %arg1: i32) -> (i32, i32) {
    %c0_i32 = arith.constant 0 : i32
    return %arg0, %arg1 : i32, i32
  }
}

</mosaic_0001>

<llo_original>
// kernel: tpu_custom_call.1
$region0: #{tpu_custom_call.1}
  #allocation0 [shape = 'u32[]', space=smem, size = 0x4, offset = 0x4, fixed_abs, tag = 'smem constant byte address 0x4 - core index']
  #allocation1 [shape = 'u32[144,128]{1,0:T(1,128)}', space=vmem, size = 0x12000, scoped, tag = 'internal scratch']
  %s0 = inlined_call_operand.vmem [shape: bf16[32,5], index: 0, kind: input, shape index: {}]
  %s1 = inlined_call_operand.vmem [shape: bf16[5,128], index: 1, kind: input, shape index: {}]
  %s2 = inlined_call_operand.vmem [shape: f32[32,1], index: 2, kind: input, shape index: {}]
  %s3 = inlined_call_operand.hbm [shape: bf16[32,128], index: 3, kind: output, shape index: {}]
  %s4 = sld [smem:[#allocation0]]
  $region22: #{tpu_custom_call.1} parent=0
    _
  %s6 = ssub.s32 1, %s4
  %s7 = scalar_select 0, %s6, %s4
  $region1: #{tpu_custom_call.1} parent=0
    #allocation2 [shape = 'u8[8192]{0}', space=vmem, size = 0x2000, scoped, tag = 'output window, operand 0, single buffered']
    #allocation3 [shape = 's32[1]{0}', space=sflag, size = 0x4, scoped, tag = 'scoped memory for tpu_custom_call.1']
    %8 = vsyncpa [#allocation3], 0
    // Predicated region
    $region2: #{tpu_custom_call.1} parent=1 // pred_check
      _
    $region3: #{tpu_custom_call.1} parent=1 // pred_check_branch
      %10 = sbr.rel (0) target = $region5
    $region4: #{tpu_custom_call.1} parent=1 // pred_region
      _
    $region5: #{tpu_custom_call.1} parent=1 // pred_fallthru
      _
    // Predicated region
    $region6: #{tpu_custom_call.1} parent=1 // pred_check
      _
    $region7: #{tpu_custom_call.1} parent=1 // pred_check_branch
      %12 = sbr.rel (0) target = $region9
    $region8: #{tpu_custom_call.1} parent=1 // pred_region
      _
    $region9: #{tpu_custom_call.1} parent=1 // pred_fallthru
      _
    // Predicated region
    $region10: #{tpu_custom_call.1} parent=1 // pred_check
      _
    $region11: #{tpu_custom_call.1} parent=1 // pred_check_branch
      %14 = sbr.rel (0) target = $region13
    $region12: #{tpu_custom_call.1} parent=1 // pred_region
      _
    $region13: #{tpu_custom_call.1} parent=1 // pred_fallthru
      _
    %v16 = vld [vmem:[%s0] sm:$0xf]
    %v17 = vld [vmem:[%s0 + $0x4] sm:$0xf]
    %v18 = vld [vmem:[%s0 + $0x8] sm:$0xf]
    %v19 = vld [vmem:[%s0 + $0xc] sm:$0xf]
    %v20 = vld [vmem:[%s1] sm:$0x7]
    %v21 = vld [vmem:[%s2] sm:$0xff]
    %v22 = vld [vmem:[%s2 + $0x8] sm:$0xff]
    %v23 = vld [vmem:[%s2 + $0x10] sm:$0xff]
    %v24 = vld [vmem:[%s2 + $0x18] sm:$0xff]
    %26 = vset.pattern.permute.xlu0 0
    %27 = vperm.xlu0 %26, %v21
    %v28 = vpop.permute.xlu0 %27
    %31 = vset.pattern.permute.xlu0 0
    %32 = vperm.xlu0 %31, %v22
    %v33 = vpop.permute.xlu0 %32
    %36 = vset.pattern.permute.xlu0 0
    %37 = vperm.xlu0 %36, %v23
    %v38 = vpop.permute.xlu0 %37
    %41 = vset.pattern.permute.xlu0 0
    %42 = vperm.xlu0 %41, %v24
    %v43 = vpop.permute.xlu0 %42
    %v49 = vunpack.c.l.b16 %v16
    %v50 = vunpack.c.l.b16 %v17
    %v51 = vunpack.c.l.b16 %v18
    %v52 = vunpack.c.l.b16 %v19
    %v53 = vpack.c.b16 %v50, %v49
    %v54 = vpack.c.b16 %v52, %v51
    %vm55 = vcmask 39936
    %v57 = vsel %vm55, %v53, 0
    %v60 = vsel %vm55, %v54, 0
    %vm62 = vcmask 1041408
    %vm63 = vcmask 1042432
    %v64 = vsel %vm62, 4294967295, 65535
    %v65 = vsel %vm63, %v64, 0
    %v67 = vand.u32 %v20, %v65
    %69 = vmatprep.subr.bf16.mxu0 0
    %70 = vmatpush1.bf16.msra.mxu0 0
    %71 = vmatprep.subr.bf16.mxu0 0
    %72 = vmatpush1.bf16.msra.mxu0 0
    %73 = vmatprep.subr.bf16.mxu0 0
    %74 = vmatpush1.bf16.msra.mxu0 0
    %75 = vmatprep.subr.bf16.mxu0 0
    %76 = vmatpush1.bf16.msra.mxu0 0
    %77 = vmatprep.subr.bf16.mxu0 0
    %78 = vmatpush1.bf16.msra.mxu0 0
    %79 = vmatprep.subr.bf16.mxu0 0
    %80 = vmatpush1.bf16.msra.mxu0 0
    %81 = vmatprep.subr.bf16.mxu0 0
    %82 = vmatpush1.bf16.msra.mxu0 0
    %83 = vmatprep.subr.bf16.mxu0 0
    %84 = vmatpush1.bf16.msra.mxu0 %v67
    %85 = vmatprep.subr.bf16.mxu0 0
    %86 = vmatpush2.bf16.msra.mxu0 0
    %87 = vmatprep.subr.bf16.mxu0 0
    %88 = vmatpush2.bf16.msra.mxu0 0
    %89 = vmatprep.subr.bf16.mxu0 0
    %90 = vmatpush2.bf16.msra.mxu0 0
    %91 = vmatprep.subr.bf16.mxu0 0
    %92 = vmatpush2.bf16.msra.mxu0 0
    %93 = vmatprep.subr.bf16.mxu0 0
    %94 = vmatpush2.bf16.msra.mxu0 0
    %95 = vmatprep.subr.bf16.mxu0 0
    %96 = vmatpush2.bf16.msra.mxu0 0
    %97 = vmatprep.subr.bf16.mxu0 0
    %98 = vmatpush2.bf16.msra.mxu0 0
    %99 = vmatprep.subr.bf16.mxu0 0
    %100 = vmatpush2.bf16.msra.mxu0 0
    %101 = vmatprep.mubr.bf16.mxu0 0
    %102 = vmatmul.mubr.bf16.gmra.mxu0 %v57
    %v103 = vpop.f32.mrf.mxu0
    %v104 = vadd.f32 %v28, %v103
    %v105 = vpop.f32.mrf.mxu0
    %v106 = vpop.f32.mrf.mxu0
    %v107 = vadd.f32 %v33, %v106
    %v108 = vpop.f32.mrf.mxu0
    %109 = vmatprep.mubr.bf16.mxu0 0
    %110 = vmatmul.mubr.bf16.gmra.mxu0 %v60
    %v111 = vpop.f32.mrf.mxu0
    %v112 = vadd.f32 %v38, %v111
    %v113 = vpop.f32.mrf.mxu0
    %v114 = vpop.f32.mrf.mxu0
    %v115 = vadd.f32 %v43, %v114
    %v116 = vpop.f32.mrf.mxu0
    %117 = vdwg.mxu0
    %v118 = vmul.f32 %v104, 0.1
    %v119 = vmul.f32 %v107, 0.1
    %v120 = vmul.f32 %v112, 0.1
    %v121 = vmul.f32 %v115, 0.1
    %v122 = vmax.f32 %v104, %v118
    %v123 = vmax.f32 %v107, %v119
    %v124 = vmax.f32 %v112, %v120
    %v125 = vmax.f32 %v115, %v121
    %v126 = vpack.c.bf16 %v123, %v122
    %v127 = vpack.c.bf16 %v125, %v124
    %v130 = vunpack.c.l.b16 %v126
    %v131 = vunpack.c.h.b16 %v126
    %v132 = vunpack.c.l.b16 %v127
    %v133 = vunpack.c.h.b16 %v127
    %v134 = vpack.c.b16 %v130, %v130
    %v135 = vpack.c.b16 %v131, %v131
    %v136 = vpack.c.b16 %v132, %v132
    %v137 = vpack.c.b16 %v133, %v133
    %142 = vst [vmem:[#allocation2] sm:$0xf] %v134
    %143 = vst [vmem:[#allocation2 + $0x4] sm:$0xf] %v135
    %144 = vst [vmem:[#allocation2 + $0x8] sm:$0xf] %v136
    %145 = vst [vmem:[#allocation2 + $0xc] sm:$0xf] %v137
    // Predicated region
    $region14: #{tpu_custom_call.1} parent=1 // pred_check
      _
    $region15: #{tpu_custom_call.1} parent=1 // pred_check_branch
      %147 = sbr.rel (0) target = $region17
    $region16: #{tpu_custom_call.1} parent=1 // pred_region
      %s149 = ssub.s32 256, 256
      %150 = vsyncadd [#allocation3], %s149
      %s151 = sshll.u32 [#allocation2], 4
      %s152 = int_to_ptr.vmem [resolvable:$true] %s151
      %157 = dma.vmem_to_hbm [thread:$0]  %s152, 256, %s3, [#allocation3], 64, 64, 4
    $region17: #{tpu_custom_call.1} parent=1 // pred_fallthru
      _
    // Predicated region
    $region18: #{tpu_custom_call.1} parent=1 // pred_check
      _
    $region19: #{tpu_custom_call.1} parent=1 // pred_check_branch
      %159 = sbr.rel (0) target = $region21
    $region20: #{tpu_custom_call.1} parent=1 // pred_region
      %160 = dma.done [#allocation3], 256
    $region21: #{tpu_custom_call.1} parent=1 // pred_fallthru
      _
    %161 = vsyncpa [#allocation3], 1

</llo_original>
